<compile_context>
chip_gen: v7x
topology: tpu7x:2x2x1
jax: 0.10.0
libtpu: 0.0.40
codegen_flags: <defaults>
</compile_context>

<pallas_src>
import functools

import jax
import jax.numpy as jnp
from jax.experimental import pallas as pl
from jax.experimental.pallas import tpu as pltpu

EPS = 1e-5
LANE = 128


def _round_up(n, m):
    return ((n + m - 1) // m) * m


# ---------------------------------------------------------------------------
# Fused kernel: mask + fused cond-affine gather + n_layers x (Linear -> BN -> affine -> ReLU)
# ---------------------------------------------------------------------------
def _fused_generator_kernel(n_layers, h_pad, labels_ref, x_ref, gb_ref, *refs):
    o_ref = refs[-1]
    w_refs = refs[:-1]                          # one bf16 weight ref per layer

    lab = labels_ref[...]                       # (B, 1) int32
    x = x_ref[...]                              # (B, F_pad) f32
    B = x.shape[0]
    inv_b = 1.0 / B

    # 1. mask the predicted feature: x[i, labels[i]] = 0
    col = jax.lax.broadcasted_iota(jnp.int32, x.shape, 1)
    h = jnp.where(col == lab, 0.0, x)

    # 2. Single fused conditional-affine gather for ALL layers:
    #    one-hot (bf16) @ packed (C_pad, 2*n_layers*H_pad) bf16 table -> f32 accumulators.
    c_pad = gb_ref.shape[0]
    ccol = jax.lax.broadcasted_iota(jnp.int32, (B, c_pad), 1)
    onehot = (ccol == lab).astype(jnp.bfloat16)                     # exact 0/1 in bf16
    gb = jnp.dot(onehot, gb_ref[...], preferred_element_type=jnp.float32)

    for k in range(n_layers):                   # static Python loop: fully unrolled
        w = w_refs[k][...]                      # (D_in_pad, H_pad) bf16, zero-padded

        # Linear (bias folded away -- cancels against the BN mean subtraction below).
        # Activations stay f32 for VPU work; cast to bf16 only at the MXU input.
        z = jnp.dot(h.astype(jnp.bfloat16), w, preferred_element_type=jnp.float32)

        # BatchNorm1d, training-mode biased batch statistics, two-pass (no cancellation)
        mean = jnp.sum(z, axis=0, keepdims=True) * inv_b
        d = z - mean
        var = jnp.sum(d * d, axis=0, keepdims=True) * inv_b
        zn = d * jax.lax.rsqrt(var + EPS)

        # Conditional affine: static 128-aligned lane slices of the fused gather result
        base = 2 * k * h_pad
        gamma = gb[:, base:base + h_pad]
        beta = gb[:, base + h_pad:base + 2 * h_pad]

        # ReLU (dropout p=0.0 -> no-op). Padded lanes stay exactly 0.
        h = jnp.maximum(gamma * zn + beta, 0.0)

    o_ref[...] = h                              # (B, H_pad): lane-dense, unmasked stores


# ---------------------------------------------------------------------------
# Parameter construction (deterministic, mimics the PyTorch __init__), lane-padded, bf16
# ---------------------------------------------------------------------------
def init_generator_params(key, num_features, n_layers, n_hiddens):
    f_pad = _round_up(num_features, LANE)
    h_pad = _round_up(n_hiddens, LANE)
    c_pad = _round_up(num_features, LANE)       # ConditionalBatchNorm num_classes == num_features

    ws = []
    # One packed gamma/beta table for ALL layers: layer k occupies lanes
    # [2k*H_pad, 2k*H_pad + H_pad) for gamma and the next H_pad lanes for beta.
    gb_tbl = jnp.zeros((c_pad, 2 * n_layers * h_pad), jnp.float32)

    for k in range(n_layers):
        d_in = num_features if k == 0 else n_hiddens
        d_in_pad = f_pad if k == 0 else h_pad
        key, kw, ke = jax.random.split(key, 3)

        # nn.Linear weight, stored pre-transposed as (d_in, n_hiddens) so the kernel does x @ W.
        # The Linear bias is omitted: it cancels exactly against BatchNorm's mean subtraction.
        bound = 1.0 / jnp.sqrt(d_in)
        w = jax.random.uniform(kw, (d_in, n_hiddens), jnp.float32, -bound, bound)
        w_pad = jnp.zeros((d_in_pad, h_pad), jnp.float32).at[:d_in, :n_hiddens].set(w)
        ws.append(w_pad.astype(jnp.bfloat16))

        # ConditionalBatchNorm1d embedding: gamma ~ N(1, 1/sqrt(H)), beta = 0.
        g = 1.0 + jax.random.normal(ke, (num_features, n_hiddens), jnp.float32) / jnp.sqrt(
            float(n_hiddens)
        )
        base = 2 * k * h_pad
        gb_tbl = gb_tbl.at[:num_features, base:base + n_hiddens].set(g)
        # beta columns stay zero

    return {
        "w": ws,
        "gb": gb_tbl.astype(jnp.bfloat16),
        "dims": (num_features, n_layers, n_hiddens, f_pad, h_pad, c_pad),
    }


# ---------------------------------------------------------------------------
# Forward wrapper: single fused pallas_call
# ---------------------------------------------------------------------------
def generator_forward(params, x, labels):
    num_features, n_layers, n_hiddens, f_pad, h_pad, c_pad = params["dims"]
    ws = params["w"]
    gb_tbl = params["gb"]

    x = x.reshape(-1, num_features).astype(jnp.float32)
    B = x.shape[0]
    x_pad = jnp.zeros((B, f_pad), jnp.float32).at[:, :num_features].set(x)
    labels2d = labels.reshape(B, 1).astype(jnp.int32)

    in_specs = [
        pl.BlockSpec((B, 1), lambda i: (0, 0)),             # labels
        pl.BlockSpec((B, f_pad), lambda i: (0, 0)),          # input activations
        pl.BlockSpec(gb_tbl.shape, lambda i: (0, 0)),        # packed gamma/beta table (bf16)
    ]
    for w in ws:
        in_specs.append(pl.BlockSpec(w.shape, lambda i: (0, 0)))

    # VMEM budget from the actual footprint (inputs may be double-buffered), with
    # headroom for in-kernel intermediates; clamp to v7x's 64 MiB physical VMEM.
    in_bytes = (labels2d.size * 4 + x_pad.size * 4 + gb_tbl.size * 2
                + sum(int(w.size) * 2 for w in ws))
    out_bytes = B * h_pad * 4
    vmem_limit = int(min(64 << 20, max(4 * (in_bytes + out_bytes) + (4 << 20), 8 << 20)))

    # Advisory cost so XLA schedules the tiny custom call tightly.
    flops = 2 * B * f_pad * h_pad
    if n_layers > 1:
        flops += (n_layers - 1) * 2 * B * h_pad * h_pad
    flops += 2 * B * c_pad * (2 * n_layers * h_pad)          # single fused gather matmul
    bytes_accessed = in_bytes + out_bytes

    kernel = functools.partial(_fused_generator_kernel, n_layers, h_pad)

    out = pl.pallas_call(
        kernel,
        out_shape=jax.ShapeDtypeStruct((B, h_pad), jnp.float32),
        grid=(1,),
        in_specs=in_specs,
        out_specs=pl.BlockSpec((B, h_pad), lambda i: (0, 0)),
        compiler_params=pltpu.CompilerParams(
            dimension_semantics=("arbitrary",),
            vmem_limit_bytes=vmem_limit,
        ),
        cost_estimate=pl.CostEstimate(
            flops=flops,
            transcendentals=n_layers * h_pad,                # rsqrt over (1, H_pad) per layer
            bytes_accessed=bytes_accessed,
        ),
    )(labels2d, x_pad, gb_tbl, *ws)

    # TODO(synk): base-class `_sample_outputs(x)` is NotImplementedError upstream;
    # return the final hidden state. (At production batch sizes, defer this trim and the
    # input zero-pad into the consumer/kernel to avoid extra HBM passes.)
    return out[:, :n_hiddens]


if __name__ == "__main__":
    B = 8
    NUM_FEATURES = 16
    N_LAYERS = 2
    N_HIDDENS = 32

    key = jax.random.PRNGKey(0)
    kx, kl, kp = jax.random.split(key, 3)

    x = jax.random.normal(kx, (B, NUM_FEATURES), jnp.float32)
    labels = jax.random.randint(kl, (B, 1), 0, NUM_FEATURES, jnp.int32)

    params = init_generator_params(kp, NUM_FEATURES, N_LAYERS, N_HIDDENS)

    out = generator_forward(params, x, labels)
    out = jax.block_until_ready(out)
    assert out.shape == (B, N_HIDDENS)
    assert bool(jnp.all(jnp.isfinite(out)))
    print("KERNEL_OK")
</pallas_src>

<mosaic_0001>
module attributes {stable_mosaic.version = 11 : i64} {
  func.func @_fused_generator_kernel(%arg0: i32, %arg1: memref<8x1xi32, #tpu.memory_space<vmem>>, %arg2: memref<8x128xf32, #tpu.memory_space<vmem>>, %arg3: memref<128x512xbf16, #tpu.memory_space<vmem>>, %arg4: memref<128x128xbf16, #tpu.memory_space<vmem>>, %arg5: memref<128x128xbf16, #tpu.memory_space<vmem>>, %arg6: memref<8x128xf32, #tpu.memory_space<vmem>>) attributes {dimension_semantics = [#tpu.dimension_semantics<arbitrary>], iteration_bounds = array<i64: 1>, scalar_prefetch = 0 : i64, scratch_operands = 0 : i64, tpu.core_type = #tpu.core_type<tc>, window_params = [{pipeline_mode = #tpu.pipeline_mode<synchronous>, transform_indices = @transform_0, window_bounds = array<i64: 8, 1>}, {pipeline_mode = #tpu.pipeline_mode<synchronous>, transform_indices = @transform_1, window_bounds = array<i64: 8, 128>}, {pipeline_mode = #tpu.pipeline_mode<synchronous>, transform_indices = @transform_2, window_bounds = array<i64: 128, 512>}, {pipeline_mode = #tpu.pipeline_mode<synchronous>, transform_indices = @transform_3, window_bounds = array<i64: 128, 128>}, {pipeline_mode = #tpu.pipeline_mode<synchronous>, transform_indices = @transform_4, window_bounds = array<i64: 128, 128>}, {pipeline_mode = #tpu.pipeline_mode<synchronous>, transform_indices = @transform_5, window_bounds = array<i64: 8, 128>}]} {
    %c0 = arith.constant 0 : index
    %c0_0 = arith.constant 0 : index
    %0 = vector.load %arg1[%c0, %c0_0] : memref<8x1xi32, #tpu.memory_space<vmem>>, vector<8x1xi32>
    %c0_1 = arith.constant 0 : index
    %c0_2 = arith.constant 0 : index
    %1 = vector.load %arg2[%c0_1, %c0_2] : memref<8x128xf32, #tpu.memory_space<vmem>>, vector<8x128xf32>
    %2 = tpu.iota {dimensions = array<i32: 1>} : vector<8x128xi32>
    %3 = vector.broadcast %0 : vector<8x1xi32> to vector<8x128xi32>
    %4 = arith.cmpi eq, %2, %3 : vector<8x128xi32>
    %cst = arith.constant 0.000000e+00 : f32
    %5 = vector.broadcast %cst : f32 to vector<8x128xf32>
    %6 = arith.select %4, %5, %1 : vector<8x128xi1>, vector<8x128xf32>
    %7 = tpu.iota {dimensions = array<i32: 1>} : vector<8x128xi32>
    %8 = vector.broadcast %0 : vector<8x1xi32> to vector<8x128xi32>
    %9 = arith.cmpi eq, %7, %8 : vector<8x128xi32>
    %10 = arith.extui %9 : vector<8x128xi1> to vector<8x128xi32>
    %11 = arith.sitofp %10 : vector<8x128xi32> to vector<8x128xf32>
    %12 = arith.truncf %11 : vector<8x128xf32> to vector<8x128xbf16>
    %c0_3 = arith.constant 0 : index
    %c0_4 = arith.constant 0 : index
    %13 = vector.load %arg3[%c0_3, %c0_4] : memref<128x512xbf16, #tpu.memory_space<vmem>>, vector<128x512xbf16>
    %cst_5 = arith.constant dense<0.000000e+00> : vector<8x512xf32>
    %14 = tpu.matmul %12, %13, %cst_5 {dimension_numbers = #tpu.dot_dimension_numbers<[1], [0], [0], [1], [0, 0, 1, 1], [], []>} : vector<8x128xbf16>, vector<128x512xbf16>, vector<8x512xf32> -> vector<8x512xf32>
    %c0_6 = arith.constant 0 : index
    %c0_7 = arith.constant 0 : index
    %15 = vector.load %arg4[%c0_6, %c0_7] : memref<128x128xbf16, #tpu.memory_space<vmem>>, vector<128x128xbf16>
    %16 = arith.truncf %6 : vector<8x128xf32> to vector<8x128xbf16>
    %cst_8 = arith.constant dense<0.000000e+00> : vector<8x128xf32>
    %17 = tpu.matmul %16, %15, %cst_8 {dimension_numbers = #tpu.dot_dimension_numbers<[1], [0], [0], [1], [0, 0, 1, 1], [], []>} : vector<8x128xbf16>, vector<128x128xbf16>, vector<8x128xf32> -> vector<8x128xf32>
    %cst_9 = arith.constant dense<0.000000e+00> : vector<128xf32>
    %18 = vector.multi_reduction <add>, %17, %cst_9 [0] : vector<8x128xf32> to vector<128xf32>
    %19 = vector.shape_cast %18 : vector<128xf32> to vector<1x128xf32>
    %cst_10 = arith.constant 1.250000e-01 : f32
    %20 = vector.broadcast %cst_10 : f32 to vector<1x128xf32>
    %21 = arith.mulf %19, %20 : vector<1x128xf32>
    %22 = vector.broadcast %21 : vector<1x128xf32> to vector<8x128xf32>
    %23 = arith.subf %17, %22 : vector<8x128xf32>
    %24 = arith.mulf %23, %23 : vector<8x128xf32>
    %cst_11 = arith.constant dense<0.000000e+00> : vector<128xf32>
    %25 = vector.multi_reduction <add>, %24, %cst_11 [0] : vector<8x128xf32> to vector<128xf32>
    %26 = vector.shape_cast %25 : vector<128xf32> to vector<1x128xf32>
    %cst_12 = arith.constant 1.250000e-01 : f32
    %27 = vector.broadcast %cst_12 : f32 to vector<1x128xf32>
    %28 = arith.mulf %26, %27 : vector<1x128xf32>
    %cst_13 = arith.constant 9.99999974E-6 : f32
    %29 = vector.broadcast %cst_13 : f32 to vector<1x128xf32>
    %30 = arith.addf %28, %29 : vector<1x128xf32>
    %31 = math.rsqrt %30 : vector<1x128xf32>
    %32 = vector.broadcast %31 : vector<1x128xf32> to vector<8x128xf32>
    %33 = arith.mulf %23, %32 : vector<8x128xf32>
    %34 = vector.extract_strided_slice %14 {offsets = [0, 0], sizes = [8, 128], strides = [1, 1]} : vector<8x512xf32> to vector<8x128xf32>
    %35 = vector.extract_strided_slice %14 {offsets = [0, 128], sizes = [8, 128], strides = [1, 1]} : vector<8x512xf32> to vector<8x128xf32>
    %36 = arith.mulf %34, %33 : vector<8x128xf32>
    %37 = arith.addf %36, %35 : vector<8x128xf32>
    %cst_14 = arith.constant 0.000000e+00 : f32
    %38 = vector.broadcast %cst_14 : f32 to vector<8x128xf32>
    %39 = arith.maximumf %37, %38 : vector<8x128xf32>
    %c0_15 = arith.constant 0 : index
    %c0_16 = arith.constant 0 : index
    %40 = vector.load %arg5[%c0_15, %c0_16] : memref<128x128xbf16, #tpu.memory_space<vmem>>, vector<128x128xbf16>
    %41 = arith.truncf %39 : vector<8x128xf32> to vector<8x128xbf16>
    %cst_17 = arith.constant dense<0.000000e+00> : vector<8x128xf32>
    %42 = tpu.matmul %41, %40, %cst_17 {dimension_numbers = #tpu.dot_dimension_numbers<[1], [0], [0], [1], [0, 0, 1, 1], [], []>} : vector<8x128xbf16>, vector<128x128xbf16>, vector<8x128xf32> -> vector<8x128xf32>
    %cst_18 = arith.constant dense<0.000000e+00> : vector<128xf32>
    %43 = vector.multi_reduction <add>, %42, %cst_18 [0] : vector<8x128xf32> to vector<128xf32>
    %44 = vector.shape_cast %43 : vector<128xf32> to vector<1x128xf32>
    %cst_19 = arith.constant 1.250000e-01 : f32
    %45 = vector.broadcast %cst_19 : f32 to vector<1x128xf32>
    %46 = arith.mulf %44, %45 : vector<1x128xf32>
    %47 = vector.broadcast %46 : vector<1x128xf32> to vector<8x128xf32>
    %48 = arith.subf %42, %47 : vector<8x128xf32>
    %49 = arith.mulf %48, %48 : vector<8x128xf32>
    %cst_20 = arith.constant dense<0.000000e+00> : vector<128xf32>
    %50 = vector.multi_reduction <add>, %49, %cst_20 [0] : vector<8x128xf32> to vector<128xf32>
    %51 = vector.shape_cast %50 : vector<128xf32> to vector<1x128xf32>
    %cst_21 = arith.constant 1.250000e-01 : f32
    %52 = vector.broadcast %cst_21 : f32 to vector<1x128xf32>
    %53 = arith.mulf %51, %52 : vector<1x128xf32>
    %cst_22 = arith.constant 9.99999974E-6 : f32
    %54 = vector.broadcast %cst_22 : f32 to vector<1x128xf32>
    %55 = arith.addf %53, %54 : vector<1x128xf32>
    %56 = math.rsqrt %55 : vector<1x128xf32>
    %57 = vector.broadcast %56 : vector<1x128xf32> to vector<8x128xf32>
    %58 = arith.mulf %48, %57 : vector<8x128xf32>
    %59 = vector.extract_strided_slice %14 {offsets = [0, 256], sizes = [8, 128], strides = [1, 1]} : vector<8x512xf32> to vector<8x128xf32>
    %60 = vector.extract_strided_slice %14 {offsets = [0, 384], sizes = [8, 128], strides = [1, 1]} : vector<8x512xf32> to vector<8x128xf32>
    %61 = arith.mulf %59, %58 : vector<8x128xf32>
    %62 = arith.addf %61, %60 : vector<8x128xf32>
    %cst_23 = arith.constant 0.000000e+00 : f32
    %63 = vector.broadcast %cst_23 : f32 to vector<8x128xf32>
    %64 = arith.maximumf %62, %63 : vector<8x128xf32>
    %c0_24 = arith.constant 0 : index
    %c0_25 = arith.constant 0 : index
    %65 = vector.load %arg6[%c0_24, %c0_25] : memref<8x128xf32, #tpu.memory_space<vmem>>, vector<8x128xf32>
    tpu.vector_store %arg6[%c0_24, %c0_25], %64 {strides = array<i32>} : memref<8x128xf32, #tpu.memory_space<vmem>>, vector<8x128xf32>,
    return
  }
  func.func @transform_0(%arg0: i32) -> (i32, i32) {
    %c0_i32 = arith.constant 0 : i32
    %c0_i32_0 = arith.constant 0 : i32
    %c0_i32_1 = arith.constant 0 : i32
    return %c0_i32, %c0_i32_0 : i32, i32
  }
  func.func @transform_1(%arg0: i32) -> (i32, i32) {
    %c0_i32 = arith.constant 0 : i32
    %c0_i32_0 = arith.constant 0 : i32
    %c0_i32_1 = arith.constant 0 : i32
    return %c0_i32, %c0_i32_0 : i32, i32
  }
  func.func @transform_2(%arg0: i32) -> (i32, i32) {
    %c0_i32 = arith.constant 0 : i32
    %c0_i32_0 = arith.constant 0 : i32
    %c0_i32_1 = arith.constant 0 : i32
    return %c0_i32, %c0_i32_0 : i32, i32
  }
  func.func @transform_3(%arg0: i32) -> (i32, i32) {
    %c0_i32 = arith.constant 0 : i32
    %c0_i32_0 = arith.constant 0 : i32
    %c0_i32_1 = arith.constant 0 : i32
    return %c0_i32, %c0_i32_0 : i32, i32
  }
  func.func @transform_4(%arg0: i32) -> (i32, i32) {
    %c0_i32 = arith.constant 0 : i32
    %c0_i32_0 = arith.constant 0 : i32
    %c0_i32_1 = arith.constant 0 : i32
    return %c0_i32, %c0_i32_0 : i32, i32
  }
  func.func @transform_5(%arg0: i32) -> (i32, i32) {
    %c0_i32 = arith.constant 0 : i32
    %c0_i32_0 = arith.constant 0 : i32
    %c0_i32_1 = arith.constant 0 : i32
    return %c0_i32, %c0_i32_0 : i32, i32
  }
}

</mosaic_0001>

<llo_original>
// kernel: tpu_custom_call.1
$region0: #{tpu_custom_call.1}
  #allocation0 [shape = 'u32[]', space=smem, size = 0x4, offset = 0x4, fixed_abs, tag = 'smem constant byte address 0x4 - core index']
  #allocation1 [shape = 'u32[144,128]{1,0:T(1,128)}', space=vmem, size = 0x12000, scoped, tag = 'internal scratch']
  %s0 = inlined_call_operand.vmem [shape: s32[8,1], index: 0, kind: input, shape index: {}]
  %s1 = inlined_call_operand.vmem [shape: f32[8,128], index: 1, kind: input, shape index: {}]
  %s2 = inlined_call_operand.hbm [shape: bf16[128,512], index: 2, kind: input, shape index: {}]
  %s3 = inlined_call_operand.hbm [shape: bf16[128,128], index: 3, kind: input, shape index: {}]
  %s4 = inlined_call_operand.hbm [shape: bf16[128,128], index: 4, kind: input, shape index: {}]
  %s5 = inlined_call_operand.hbm [shape: f32[8,128], index: 5, kind: output, shape index: {}]
  %s6 = sld [smem:[#allocation0]]
  $region42: #{tpu_custom_call.1} parent=0
    _
  %s8 = ssub.s32 1, %s6
  %s9 = scalar_select 0, %s8, %s6
  $region1: #{tpu_custom_call.1} parent=0
    #allocation2 [shape = 'u8[131072]{0}', space=vmem, size = 0x20000, scoped, tag = 'input window, operand 2, single buffered']
    #allocation3 [shape = 's32[1]{0}', space=sflag, size = 0x4, scoped, tag = 'scoped memory for tpu_custom_call.1']
    #allocation4 [shape = 's32[1]{0}', space=sflag, size = 0x4, scoped, tag = 'scoped memory for tpu_custom_call.1']
    #allocation5 [shape = 'u8[32768]{0}', space=vmem, size = 0x8000, scoped, tag = 'input window, operand 3, single buffered']
    #allocation6 [shape = 's32[1]{0}', space=sflag, size = 0x4, scoped, tag = 'scoped memory for tpu_custom_call.1']
    #allocation7 [shape = 'u8[32768]{0}', space=vmem, size = 0x8000, scoped, tag = 'input window, operand 4, single buffered']
    #allocation8 [shape = 'u8[4096]{0}', space=vmem, size = 0x1000, scoped, tag = 'output window, operand 0, single buffered']
    %10 = vsyncpa [#allocation3], 0
    %11 = vsyncpa [#allocation6], 0
    %12 = vsyncpa [#allocation4], 0
    // Predicated region
    $region2: #{tpu_custom_call.1} parent=1 // pred_check
      _
    $region3: #{tpu_custom_call.1} parent=1 // pred_check_branch
      %14 = sbr.rel (0) target = $region5
    $region4: #{tpu_custom_call.1} parent=1 // pred_region
      _
    $region5: #{tpu_custom_call.1} parent=1 // pred_fallthru
      _
    // Predicated region
    $region6: #{tpu_custom_call.1} parent=1 // pred_check
      _
    $region7: #{tpu_custom_call.1} parent=1 // pred_check_branch
      %16 = sbr.rel (0) target = $region9
    $region8: #{tpu_custom_call.1} parent=1 // pred_region
      _
    $region9: #{tpu_custom_call.1} parent=1 // pred_fallthru
      _
    // Predicated region
    $region10: #{tpu_custom_call.1} parent=1 // pred_check
      _
    $region11: #{tpu_custom_call.1} parent=1 // pred_check_branch
      %18 = sbr.rel (0) target = $region13
    $region12: #{tpu_custom_call.1} parent=1 // pred_region
      %s20 = ssub.s32 4096, 4096
      %21 = vsyncadd [#allocation3], %s20
      %s22 = sshll.u32 [#allocation2], 4
      %s23 = int_to_ptr.vmem [resolvable:$true] %s22
      %28 = dma.hbm_to_vmem [thread:$0]  %s2, 4096, %s23, [#allocation3], 256, 256, 16
    $region13: #{tpu_custom_call.1} parent=1 // pred_fallthru
      _
    // Predicated region
    $region14: #{tpu_custom_call.1} parent=1 // pred_check
      _
    $region15: #{tpu_custom_call.1} parent=1 // pred_check_branch
      %30 = sbr.rel (0) target = $region17
    $region16: #{tpu_custom_call.1} parent=1 // pred_region
      %s32 = ssub.s32 1024, 1024
      %33 = vsyncadd [#allocation6], %s32
      %s34 = sshll.u32 [#allocation5], 4
      %s35 = int_to_ptr.vmem [resolvable:$true] %s34
      %40 = dma.hbm_to_vmem [thread:$0]  %s3, 1024, %s35, [#allocation6], 64, 64, 4
    $region17: #{tpu_custom_call.1} parent=1 // pred_fallthru
      _
    // Predicated region
    $region18: #{tpu_custom_call.1} parent=1 // pred_check
      _
    $region19: #{tpu_custom_call.1} parent=1 // pred_check_branch
      %42 = sbr.rel (0) target = $region21
    $region20: #{tpu_custom_call.1} parent=1 // pred_region
      %s44 = ssub.s32 1024, 1024
      %45 = vsyncadd [#allocation6], %s44
      %s46 = sshll.u32 [#allocation7], 4
      %s47 = int_to_ptr.vmem [resolvable:$true] %s46
      %52 = dma.hbm_to_vmem [thread:$0]  %s4, 1024, %s47, [#allocation6], 64, 64, 4
    $region21: #{tpu_custom_call.1} parent=1 // pred_fallthru
      _
    // Predicated region
    $region22: #{tpu_custom_call.1} parent=1 // pred_check
      _
    $region23: #{tpu_custom_call.1} parent=1 // pred_check_branch
      %54 = sbr.rel (0) target = $region25
    $region24: #{tpu_custom_call.1} parent=1 // pred_region
      %55 = dma.done [#allocation3], 4096
    $region25: #{tpu_custom_call.1} parent=1 // pred_fallthru
      _
    // Predicated region
    $region26: #{tpu_custom_call.1} parent=1 // pred_check
      _
    $region27: #{tpu_custom_call.1} parent=1 // pred_check_branch
      %57 = sbr.rel (0) target = $region29
    $region28: #{tpu_custom_call.1} parent=1 // pred_region
      %58 = dma.done [#allocation6], 1024
    $region29: #{tpu_custom_call.1} parent=1 // pred_fallthru
      _
    // Predicated region
    $region30: #{tpu_custom_call.1} parent=1 // pred_check
      _
    $region31: #{tpu_custom_call.1} parent=1 // pred_check_branch
      %60 = sbr.rel (0) target = $region33
    $region32: #{tpu_custom_call.1} parent=1 // pred_region
      %61 = dma.done [#allocation6], 1024
    $region33: #{tpu_custom_call.1} parent=1 // pred_fallthru
      _
    %v63 = vld [vmem:[%s0] sm:$0xff]
    %v64 = vld [vmem:[%s1] sm:$0xff]
    %v65 = vlaneseq
    %v66 = vand.u32 %v65, 127
    %67 = vset.pattern.permute.xlu0 0
    %68 = vperm.xlu0 %67, %v63
    %v69 = vpop.permute.xlu0 %68
    %vm70 = vcmp.eq.s32.totalorder %v66, %v69
    %v71 = vsel %vm70, 0.0, %v64
    %v72 = vsel %vm70, 1, 0
    %v73 = vcvt.s32.f32 %v72
    %v74 = vpack.c.bf16 %v73, %v73
    %v75 = vld [vmem:[#allocation2] sm:$0xff]
    %v76 = vld [vmem:[#allocation2 + $0x8] sm:$0xff]
    %v77 = vld [vmem:[#allocation2 + $0x10] sm:$0xff]
    %v78 = vld [vmem:[#allocation2 + $0x18] sm:$0xff]
    %v79 = vld [vmem:[#allocation2 + $0x20] sm:$0xff]
    %v80 = vld [vmem:[#allocation2 + $0x28] sm:$0xff]
    %v81 = vld [vmem:[#allocation2 + $0x30] sm:$0xff]
    %v82 = vld [vmem:[#allocation2 + $0x38] sm:$0xff]
    %v83 = vld [vmem:[#allocation2 + $0x40] sm:$0xff]
    %v84 = vld [vmem:[#allocation2 + $0x48] sm:$0xff]
    %v85 = vld [vmem:[#allocation2 + $0x50] sm:$0xff]
    %v86 = vld [vmem:[#allocation2 + $0x58] sm:$0xff]
    %v87 = vld [vmem:[#allocation2 + $0x60] sm:$0xff]
    %v88 = vld [vmem:[#allocation2 + $0x68] sm:$0xff]
    %v89 = vld [vmem:[#allocation2 + $0x70] sm:$0xff]
    %v90 = vld [vmem:[#allocation2 + $0x78] sm:$0xff]
    %v91 = vld [vmem:[#allocation2 + $0x80] sm:$0xff]
    %v92 = vld [vmem:[#allocation2 + $0x88] sm:$0xff]
    %v93 = vld [vmem:[#allocation2 + $0x90] sm:$0xff]
    %v94 = vld [vmem:[#allocation2 + $0x98] sm:$0xff]
    %v95 = vld [vmem:[#allocation2 + $0xa0] sm:$0xff]
    %v96 = vld [vmem:[#allocation2 + $0xa8] sm:$0xff]
    %v97 = vld [vmem:[#allocation2 + $0xb0] sm:$0xff]
    %v98 = vld [vmem:[#allocation2 + $0xb8] sm:$0xff]
    %v99 = vld [vmem:[#allocation2 + $0xc0] sm:$0xff]
    %v100 = vld [vmem:[#allocation2 + $0xc8] sm:$0xff]
    %v101 = vld [vmem:[#allocation2 + $0xd0] sm:$0xff]
    %v102 = vld [vmem:[#allocation2 + $0xd8] sm:$0xff]
    %v103 = vld [vmem:[#allocation2 + $0xe0] sm:$0xff]
    %v104 = vld [vmem:[#allocation2 + $0xe8] sm:$0xff]
    %v105 = vld [vmem:[#allocation2 + $0xf0] sm:$0xff]
    %v106 = vld [vmem:[#allocation2 + $0xf8] sm:$0xff]
    %v139 = vunpack.c.l.b16 %v75
    %v140 = vunpack.c.h.b16 %v75
    %v141 = vunpack.c.l.b16 %v76
    %v142 = vunpack.c.h.b16 %v76
    %v143 = vunpack.c.l.b16 %v77
    %v144 = vunpack.c.h.b16 %v77
    %v145 = vunpack.c.l.b16 %v78
    %v146 = vunpack.c.h.b16 %v78
    %v147 = vunpack.c.l.b16 %v79
    %v148 = vunpack.c.h.b16 %v79
    %v149 = vunpack.c.l.b16 %v80
    %v150 = vunpack.c.h.b16 %v80
    %v151 = vunpack.c.l.b16 %v81
    %v152 = vunpack.c.h.b16 %v81
    %v153 = vunpack.c.l.b16 %v82
    %v154 = vunpack.c.h.b16 %v82
    %v155 = vunpack.c.l.b16 %v83
    %v156 = vunpack.c.h.b16 %v83
    %v157 = vunpack.c.l.b16 %v84
    %v158 = vunpack.c.h.b16 %v84
    %v159 = vunpack.c.l.b16 %v85
    %v160 = vunpack.c.h.b16 %v85
    %v161 = vunpack.c.l.b16 %v86
    %v162 = vunpack.c.h.b16 %v86
    %v163 = vunpack.c.l.b16 %v87
    %v164 = vunpack.c.h.b16 %v87
    %v165 = vunpack.c.l.b16 %v88
    %v166 = vunpack.c.h.b16 %v88
    %v167 = vunpack.c.l.b16 %v89
    %v168 = vunpack.c.h.b16 %v89
    %v169 = vunpack.c.l.b16 %v90
    %v170 = vunpack.c.h.b16 %v90
    %v171 = vunpack.c.l.b16 %v91
    %v172 = vunpack.c.h.b16 %v91
    %v173 = vunpack.c.l.b16 %v92
    %v174 = vunpack.c.h.b16 %v92
    %v175 = vunpack.c.l.b16 %v93
    %v176 = vunpack.c.h.b16 %v93
    %v177 = vunpack.c.l.b16 %v94
    %v178 = vunpack.c.h.b16 %v94
    %v179 = vunpack.c.l.b16 %v95
    %v180 = vunpack.c.h.b16 %v95
    %v181 = vunpack.c.l.b16 %v96
    %v182 = vunpack.c.h.b16 %v96
    %v183 = vunpack.c.l.b16 %v97
    %v184 = vunpack.c.h.b16 %v97
    %v185 = vunpack.c.l.b16 %v98
    %v186 = vunpack.c.h.b16 %v98
    %v187 = vunpack.c.l.b16 %v99
    %v188 = vunpack.c.h.b16 %v99
    %v189 = vunpack.c.l.b16 %v100
    %v190 = vunpack.c.h.b16 %v100
    %v191 = vunpack.c.l.b16 %v101
    %v192 = vunpack.c.h.b16 %v101
    %v193 = vunpack.c.l.b16 %v102
    %v194 = vunpack.c.h.b16 %v102
    %v195 = vunpack.c.l.b16 %v103
    %v196 = vunpack.c.h.b16 %v103
    %v197 = vunpack.c.l.b16 %v104
    %v198 = vunpack.c.h.b16 %v104
    %v199 = vunpack.c.l.b16 %v105
    %v200 = vunpack.c.h.b16 %v105
    %v201 = vunpack.c.l.b16 %v106
    %v202 = vunpack.c.h.b16 %v106
    %v203 = vpack.c.b16 %v143, %v139
    %v204 = vpack.c.b16 %v144, %v140
    %v205 = vpack.c.b16 %v145, %v141
    %v206 = vpack.c.b16 %v146, %v142
    %v207 = vpack.c.b16 %v151, %v147
    %v208 = vpack.c.b16 %v152, %v148
    %v209 = vpack.c.b16 %v153, %v149
    %v210 = vpack.c.b16 %v154, %v150
    %v211 = vpack.c.b16 %v159, %v155
    %v212 = vpack.c.b16 %v160, %v156
    %v213 = vpack.c.b16 %v161, %v157
    %v214 = vpack.c.b16 %v162, %v158
    %v215 = vpack.c.b16 %v167, %v163
    %v216 = vpack.c.b16 %v168, %v164
    %v217 = vpack.c.b16 %v169, %v165
    %v218 = vpack.c.b16 %v170, %v166
    %v219 = vpack.c.b16 %v175, %v171
    %v220 = vpack.c.b16 %v176, %v172
    %v221 = vpack.c.b16 %v177, %v173
    %v222 = vpack.c.b16 %v178, %v174
    %v223 = vpack.c.b16 %v183, %v179
    %v224 = vpack.c.b16 %v184, %v180
    %v225 = vpack.c.b16 %v185, %v181
    %v226 = vpack.c.b16 %v186, %v182
    %v227 = vpack.c.b16 %v191, %v187
    %v228 = vpack.c.b16 %v192, %v188
    %v229 = vpack.c.b16 %v193, %v189
    %v230 = vpack.c.b16 %v194, %v190
    %v231 = vpack.c.b16 %v199, %v195
    %v232 = vpack.c.b16 %v200, %v196
    %v233 = vpack.c.b16 %v201, %v197
    %v234 = vpack.c.b16 %v202, %v198
    %267 = vmatprep.subr.bf16.mxu0 %v204
    %268 = vmatpush1.bf16.msra.mxu0 %v203
    %269 = vmatprep.subr.bf16.mxu0 %v208
    %270 = vmatpush1.bf16.msra.mxu0 %v207
    %271 = vmatprep.subr.bf16.mxu0 %v212
    %272 = vmatpush1.bf16.msra.mxu0 %v211
    %273 = vmatprep.subr.bf16.mxu0 %v216
    %274 = vmatpush1.bf16.msra.mxu0 %v215
    %275 = vmatprep.subr.bf16.mxu0 %v220
    %276 = vmatpush1.bf16.msra.mxu0 %v219
    %277 = vmatprep.subr.bf16.mxu0 %v224
    %278 = vmatpush1.bf16.msra.mxu0 %v223
    %279 = vmatprep.subr.bf16.mxu0 %v228
    %280 = vmatpush1.bf16.msra.mxu0 %v227
    %281 = vmatprep.subr.bf16.mxu0 %v232
    %282 = vmatpush1.bf16.msra.mxu0 %v231
    %283 = vmatprep.subr.bf16.mxu0 0
    %284 = vmatpush1.bf16.msra.mxu0 0
    %285 = vmatprep.subr.bf16.mxu0 0
    %286 = vmatpush1.bf16.msra.mxu0 0
    %287 = vmatprep.subr.bf16.mxu0 0
    %288 = vmatpush1.bf16.msra.mxu0 0
    %289 = vmatprep.subr.bf16.mxu0 0
    %290 = vmatpush1.bf16.msra.mxu0 0
    %291 = vmatprep.subr.bf16.mxu0 0
    %292 = vmatpush1.bf16.msra.mxu0 0
    %293 = vmatprep.subr.bf16.mxu0 0
    %294 = vmatpush1.bf16.msra.mxu0 0
    %295 = vmatprep.subr.bf16.mxu0 0
    %296 = vmatpush1.bf16.msra.mxu0 0
    %297 = vmatprep.subr.bf16.mxu0 0
    %298 = vmatpush1.bf16.msra.mxu0 0
    %299 = vmatprep.mubr.bf16.mxu0 0
    %300 = vmatmul.mubr.bf16.gmra.mrb[0].mxu0 %v74
    %v301 = vpop.f32.mrb[0].mxu0
    %v302 = vadd.f32 0.0, %v301
    %v303 = vpop.f32.mrb[0].mxu0
    %v304 = vadd.f32 0.0, %v303
    %v305 = vpop.f32.mrb[0].mxu0
    %v306 = vpop.f32.mrb[0].mxu0
    %307 = vdwg.mxu0
    %308 = vmatprep.subr.bf16.mxu0 %v206
    %309 = vmatpush1.bf16.msra.mxu0 %v205
    %310 = vmatprep.subr.bf16.mxu0 %v210
    %311 = vmatpush1.bf16.msra.mxu0 %v209
    %312 = vmatprep.subr.bf16.mxu0 %v214
    %313 = vmatpush1.bf16.msra.mxu0 %v213
    %314 = vmatprep.subr.bf16.mxu0 %v218
    %315 = vmatpush1.bf16.msra.mxu0 %v217
    %316 = vmatprep.subr.bf16.mxu0 %v222
    %317 = vmatpush1.bf16.msra.mxu0 %v221
    %318 = vmatprep.subr.bf16.mxu0 %v226
    %319 = vmatpush1.bf16.msra.mxu0 %v225
    %320 = vmatprep.subr.bf16.mxu0 %v230
    %321 = vmatpush1.bf16.msra.mxu0 %v229
    %322 = vmatprep.subr.bf16.mxu0 %v234
    %323 = vmatpush1.bf16.msra.mxu0 %v233
    %324 = vmatprep.subr.bf16.mxu0 0
    %325 = vmatpush1.bf16.msra.mxu0 0
    %326 = vmatprep.subr.bf16.mxu0 0
    %327 = vmatpush1.bf16.msra.mxu0 0
    %328 = vmatprep.subr.bf16.mxu0 0
    %329 = vmatpush1.bf16.msra.mxu0 0
    %330 = vmatprep.subr.bf16.mxu0 0
    %331 = vmatpush1.bf16.msra.mxu0 0
    %332 = vmatprep.subr.bf16.mxu0 0
    %333 = vmatpush1.bf16.msra.mxu0 0
    %334 = vmatprep.subr.bf16.mxu0 0
    %335 = vmatpush1.bf16.msra.mxu0 0
    %336 = vmatprep.subr.bf16.mxu0 0
    %337 = vmatpush1.bf16.msra.mxu0 0
    %338 = vmatprep.subr.bf16.mxu0 0
    %339 = vmatpush1.bf16.msra.mxu0 0
    %340 = vmatprep.mubr.bf16.mxu0 0
    %341 = vmatmul.mubr.bf16.gmra.mrb[0].mxu0 %v74
    %v342 = vpop.f32.mrb[0].mxu0
    %v343 = vadd.f32 0.0, %v342
    %v344 = vpop.f32.mrb[0].mxu0
    %v345 = vadd.f32 0.0, %v344
    %v346 = vpop.f32.mrb[0].mxu0
    %v347 = vpop.f32.mrb[0].mxu0
    %348 = vdwg.mxu0
    %v349 = vld [vmem:[#allocation5] sm:$0xf]
    %v350 = vld [vmem:[#allocation5 + $0x4] sm:$0xf]
    %v351 = vld [vmem:[#allocation5 + $0x8] sm:$0xf]
    %v352 = vld [vmem:[#allocation5 + $0xc] sm:$0xf]
    %v353 = vld [vmem:[#allocation5 + $0x10] sm:$0xf]
    %v354 = vld [vmem:[#allocation5 + $0x14] sm:$0xf]
    %v355 = vld [vmem:[#allocation5 + $0x18] sm:$0xf]
    %v356 = vld [vmem:[#allocation5 + $0x1c] sm:$0xf]
    %v357 = vld [vmem:[#allocation5 + $0x20] sm:$0xf]
    %v358 = vld [vmem:[#allocation5 + $0x24] sm:$0xf]
    %v359 = vld [vmem:[#allocation5 + $0x28] sm:$0xf]
    %v360 = vld [vmem:[#allocation5 + $0x2c] sm:$0xf]
    %v361 = vld [vmem:[#allocation5 + $0x30] sm:$0xf]
    %v362 = vld [vmem:[#allocation5 + $0x34] sm:$0xf]
    %v363 = vld [vmem:[#allocation5 + $0x38] sm:$0xf]
    %v364 = vld [vmem:[#allocation5 + $0x3c] sm:$0xf]
    %v365 = vpack.c.bf16 %v71, %v71
    %v382 = vunpack.c.l.b16 %v349
    %v383 = vunpack.c.l.b16 %v350
    %v384 = vunpack.c.l.b16 %v351
    %v385 = vunpack.c.l.b16 %v352
    %v386 = vunpack.c.l.b16 %v353
    %v387 = vunpack.c.l.b16 %v354
    %v388 = vunpack.c.l.b16 %v355
    %v389 = vunpack.c.l.b16 %v356
    %v390 = vunpack.c.l.b16 %v357
    %v391 = vunpack.c.l.b16 %v358
    %v392 = vunpack.c.l.b16 %v359
    %v393 = vunpack.c.l.b16 %v360
    %v394 = vunpack.c.l.b16 %v361
    %v395 = vunpack.c.l.b16 %v362
    %v396 = vunpack.c.l.b16 %v363
    %v397 = vunpack.c.l.b16 %v364
    %v398 = vpack.c.b16 %v383, %v382
    %v399 = vpack.c.b16 %v385, %v384
    %v400 = vpack.c.b16 %v387, %v386
    %v401 = vpack.c.b16 %v389, %v388
    %v402 = vpack.c.b16 %v391, %v390
    %v403 = vpack.c.b16 %v393, %v392
    %v404 = vpack.c.b16 %v395, %v394
    %v405 = vpack.c.b16 %v397, %v396
    %414 = vmatprep.subr.bf16.mxu0 0
    %415 = vmatpush1.bf16.msra.mxu0 %v398
    %416 = vmatprep.subr.bf16.mxu0 0
    %417 = vmatpush1.bf16.msra.mxu0 %v399
    %418 = vmatprep.subr.bf16.mxu0 0
    %419 = vmatpush1.bf16.msra.mxu0 %v400
    %420 = vmatprep.subr.bf16.mxu0 0
    %421 = vmatpush1.bf16.msra.mxu0 %v401
    %422 = vmatprep.subr.bf16.mxu0 0
    %423 = vmatpush1.bf16.msra.mxu0 %v402
    %424 = vmatprep.subr.bf16.mxu0 0
    %425 = vmatpush1.bf16.msra.mxu0 %v403
    %426 = vmatprep.subr.bf16.mxu0 0
    %427 = vmatpush1.bf16.msra.mxu0 %v404
    %428 = vmatprep.subr.bf16.mxu0 0
    %429 = vmatpush1.bf16.msra.mxu0 %v405
    %430 = vmatprep.subr.bf16.mxu0 0
    %431 = vmatpush1.bf16.msra.mxu0 0
    %432 = vmatprep.subr.bf16.mxu0 0
    %433 = vmatpush1.bf16.msra.mxu0 0
    %434 = vmatprep.subr.bf16.mxu0 0
    %435 = vmatpush1.bf16.msra.mxu0 0
    %436 = vmatprep.subr.bf16.mxu0 0
    %437 = vmatpush1.bf16.msra.mxu0 0
    %438 = vmatprep.subr.bf16.mxu0 0
    %439 = vmatpush1.bf16.msra.mxu0 0
    %440 = vmatprep.subr.bf16.mxu0 0
    %441 = vmatpush1.bf16.msra.mxu0 0
    %442 = vmatprep.subr.bf16.mxu0 0
    %443 = vmatpush1.bf16.msra.mxu0 0
    %444 = vmatprep.subr.bf16.mxu0 0
    %445 = vmatpush1.bf16.msra.mxu0 0
    %446 = vmatprep.mubr.bf16.mxu0 0
    %447 = vmatmul.mubr.bf16.gmra.mrb[0].mxu0 %v365
    %v448 = vpop.f32.mrb[0].mxu0
    %v449 = vadd.f32 0.0, %v448
    %v450 = vpop.f32.mrb[0].mxu0
    %v451 = vpop.f32.mrb[0].mxu0
    %v452 = vpop.f32.mrb[0].mxu0
    %453 = vdwg.mxu0
    %v454 = vrot.slane %v449, 4
    %v455 = vadd.f32 %v449, %v454
    %v456 = vrot.slane %v455, 2
    %v457 = vadd.f32 %v455, %v456
    %v458 = vrot.slane %v457, 1
    %v459 = vadd.f32 %v457, %v458
    %v460 = vmul.f32 %v459, 0.125
    %v461 = vsub.f32 %v449, %v460
    %v462 = vmul.f32 %v461, %v461
    %v463 = vrot.slane %v462, 4
    %v464 = vadd.f32 %v462, %v463
    %v465 = vrot.slane %v464, 2
    %v466 = vadd.f32 %v464, %v465
    %v467 = vrot.slane %v466, 1
    %v468 = vadd.f32 %v466, %v467
    %v469 = vmul.f32 %v468, 0.125
    %v470 = vadd.f32 %v469, 1e-05
    %v471 = vrsqrt.pop %v470
    %v472 = vmul.f32 %v461, %v471
    %v473 = vmul.f32 %v302, %v472
    %v474 = vadd.f32 %v473, %v304
    %v475 = vmax.f32 %v474, 0.0
    %v476 = vld [vmem:[#allocation7] sm:$0xf]
    %v477 = vld [vmem:[#allocation7 + $0x4] sm:$0xf]
    %v478 = vld [vmem:[#allocation7 + $0x8] sm:$0xf]
    %v479 = vld [vmem:[#allocation7 + $0xc] sm:$0xf]
    %v480 = vld [vmem:[#allocation7 + $0x10] sm:$0xf]
    %v481 = vld [vmem:[#allocation7 + $0x14] sm:$0xf]
    %v482 = vld [vmem:[#allocation7 + $0x18] sm:$0xf]
    %v483 = vld [vmem:[#allocation7 + $0x1c] sm:$0xf]
    %v484 = vld [vmem:[#allocation7 + $0x20] sm:$0xf]
    %v485 = vld [vmem:[#allocation7 + $0x24] sm:$0xf]
    %v486 = vld [vmem:[#allocation7 + $0x28] sm:$0xf]
    %v487 = vld [vmem:[#allocation7 + $0x2c] sm:$0xf]
    %v488 = vld [vmem:[#allocation7 + $0x30] sm:$0xf]
    %v489 = vld [vmem:[#allocation7 + $0x34] sm:$0xf]
    %v490 = vld [vmem:[#allocation7 + $0x38] sm:$0xf]
    %v491 = vld [vmem:[#allocation7 + $0x3c] sm:$0xf]
    %v492 = vpack.c.bf16 %v475, %v475
    %v509 = vunpack.c.l.b16 %v476
    %v510 = vunpack.c.l.b16 %v477
    %v511 = vunpack.c.l.b16 %v478
    %v512 = vunpack.c.l.b16 %v479
    %v513 = vunpack.c.l.b16 %v480
    %v514 = vunpack.c.l.b16 %v481
    %v515 = vunpack.c.l.b16 %v482
    %v516 = vunpack.c.l.b16 %v483
    %v517 = vunpack.c.l.b16 %v484
    %v518 = vunpack.c.l.b16 %v485
    %v519 = vunpack.c.l.b16 %v486
    %v520 = vunpack.c.l.b16 %v487
    %v521 = vunpack.c.l.b16 %v488
    %v522 = vunpack.c.l.b16 %v489
    %v523 = vunpack.c.l.b16 %v490
    %v524 = vunpack.c.l.b16 %v491
    %v525 = vpack.c.b16 %v510, %v509
    %v526 = vpack.c.b16 %v512, %v511
    %v527 = vpack.c.b16 %v514, %v513
    %v528 = vpack.c.b16 %v516, %v515
    %v529 = vpack.c.b16 %v518, %v517
    %v530 = vpack.c.b16 %v520, %v519
    %v531 = vpack.c.b16 %v522, %v521
    %v532 = vpack.c.b16 %v524, %v523
    %541 = vmatprep.subr.bf16.mxu0 0
    %542 = vmatpush1.bf16.msra.mxu0 %v525
    %543 = vmatprep.subr.bf16.mxu0 0
    %544 = vmatpush1.bf16.msra.mxu0 %v526
    %545 = vmatprep.subr.bf16.mxu0 0
    %546 = vmatpush1.bf16.msra.mxu0 %v527
    %547 = vmatprep.subr.bf16.mxu0 0
    %548 = vmatpush1.bf16.msra.mxu0 %v528
    %549 = vmatprep.subr.bf16.mxu0 0
    %550 = vmatpush1.bf16.msra.mxu0 %v529
    %551 = vmatprep.subr.bf16.mxu0 0
    %552 = vmatpush1.bf16.msra.mxu0 %v530
    %553 = vmatprep.subr.bf16.mxu0 0
    %554 = vmatpush1.bf16.msra.mxu0 %v531
    %555 = vmatprep.subr.bf16.mxu0 0
    %556 = vmatpush1.bf16.msra.mxu0 %v532
    %557 = vmatprep.subr.bf16.mxu0 0
    %558 = vmatpush1.bf16.msra.mxu0 0
    %559 = vmatprep.subr.bf16.mxu0 0
    %560 = vmatpush1.bf16.msra.mxu0 0
    %561 = vmatprep.subr.bf16.mxu0 0
    %562 = vmatpush1.bf16.msra.mxu0 0
    %563 = vmatprep.subr.bf16.mxu0 0
    %564 = vmatpush1.bf16.msra.mxu0 0
    %565 = vmatprep.subr.bf16.mxu0 0
    %566 = vmatpush1.bf16.msra.mxu0 0
    %567 = vmatprep.subr.bf16.mxu0 0
    %568 = vmatpush1.bf16.msra.mxu0 0
    %569 = vmatprep.subr.bf16.mxu0 0
    %570 = vmatpush1.bf16.msra.mxu0 0
    %571 = vmatprep.subr.bf16.mxu0 0
    %572 = vmatpush1.bf16.msra.mxu0 0
    %573 = vmatprep.mubr.bf16.mxu0 0
    %574 = vmatmul.mubr.bf16.gmra.mrb[0].mxu0 %v492
    %v575 = vpop.f32.mrb[0].mxu0
    %v576 = vadd.f32 0.0, %v575
    %v577 = vpop.f32.mrb[0].mxu0
    %v578 = vpop.f32.mrb[0].mxu0
    %v579 = vpop.f32.mrb[0].mxu0
    %580 = vdwg.mxu0
    %v581 = vrot.slane %v576, 4
    %v582 = vadd.f32 %v576, %v581
    %v583 = vrot.slane %v582, 2
    %v584 = vadd.f32 %v582, %v583
    %v585 = vrot.slane %v584, 1
    %v586 = vadd.f32 %v584, %v585
    %v587 = vmul.f32 %v586, 0.125
    %v588 = vsub.f32 %v576, %v587
    %v589 = vmul.f32 %v588, %v588
    %v590 = vrot.slane %v589, 4
    %v591 = vadd.f32 %v589, %v590
    %v592 = vrot.slane %v591, 2
    %v593 = vadd.f32 %v591, %v592
    %v594 = vrot.slane %v593, 1
    %v595 = vadd.f32 %v593, %v594
    %v596 = vmul.f32 %v595, 0.125
    %v597 = vadd.f32 %v596, 1e-05
    %v598 = vrsqrt.pop %v597
    %v599 = vmul.f32 %v588, %v598
    %v600 = vmul.f32 %v343, %v599
    %v601 = vadd.f32 %v600, %v345
    %v602 = vmax.f32 %v601, 0.0
    %603 = vst [vmem:[#allocation8] sm:$0xff] %v602
    // Predicated region
    $region34: #{tpu_custom_call.1} parent=1 // pred_check
      _
    $region35: #{tpu_custom_call.1} parent=1 // pred_check_branch
      %605 = sbr.rel (0) target = $region37
    $region36: #{tpu_custom_call.1} parent=1 // pred_region
      %s607 = ssub.s32 128, 128
      %608 = vsyncadd [#allocation4], %s607
      %s610 = sshll.u32 [#allocation8], 4
      %s611 = int_to_ptr.vmem [resolvable:$true] %s610
      %613 = dma.vmem_to_hbm [thread:$0]  %s611, 128, %s5, [#allocation4]
    $region37: #{tpu_custom_call.1} parent=1 // pred_fallthru
      _
    // Predicated region
    $region38: #{tpu_custom_call.1} parent=1 // pred_check
      _
    $region39: #{tpu_custom_call.1} parent=1 // pred_check_branch
      %615 = sbr.rel (0) target = $region41
    $region40: #{tpu_custom_call.1} parent=1 // pred_region
      %616 = dma.done [#allocation4], 128
    $region41: #{tpu_custom_call.1} parent=1 // pred_fallthru
      _
    %617 = vsyncpa [#allocation3], 1
    %618 = vsyncpa [#allocation6], 1
    %619 = vsyncpa [#allocation4], 1

</llo_original>
